<compile_context>
chip_gen: v5e
topology: v5e:2x2
jax: 0.10.0
libtpu: 0.0.40
codegen_flags: <defaults>
</compile_context>

<pallas_src>
import functools

import jax
import jax.numpy as jnp
from jax.experimental import pallas as pl
from jax.experimental.pallas import tpu as pltpu


def _round_up(x, m):
    return ((x + m - 1) // m) * m


def _cdiv(a, b):
    return (a + b - 1) // b


def _vmem_physical_bytes():
    """Physical VMEM per TensorCore; conservative 64 MiB (v7x) fallback."""
    try:
        info = pltpu.get_tpu_info()
        cap = getattr(info, "vmem_capacity_bytes", None)
        if cap:
            return int(cap)
    except Exception:
        pass
    return 64 << 20


def _resident_footprint(bm, K, H_pad, N_pad, x_bytes, w_bytes):
    """Conservative per-step VMEM bytes for the W1-resident (1-D grid) path."""
    return (2 * bm * K * x_bytes            # X tiles (double-buffered, native dtype)
            + 2 * K * H_pad * w_bytes       # W1 resident (x2: conservative)
            + 2 * H_pad * N_pad * 4         # W2 resident f32 (x2: conservative)
            + 2 * bm * max(N_pad, 128) * 4  # output tiles (lane-padded in VMEM)
            + bm * H_pad * 4                # fc1 result temporary (f32)
            + bm * N_pad * 4)               # fc2 result temporary (f32)


def _ktiled_footprint(bm, tk, H_pad, N_pad, x_bytes, w_bytes):
    return (2 * bm * tk * x_bytes
            + 2 * tk * H_pad * w_bytes
            + 2 * H_pad * N_pad * 4
            + 2 * bm * max(N_pad, 128) * 4
            + bm * H_pad * 4                # h_acc scratch (f32)
            + bm * N_pad * 4)


def _choose_bm(B, bm_max, fits):
    """Batch tile: multiple of 8, >=2 tiles when B > 8 (keeps both v7x
    TensorCores busy), shrunk until `fits(bm)` holds (or bm == 8)."""
    if B <= 8:
        return B                            # single block == full batch dim
    bm = min(bm_max, _round_up(_cdiv(B, 2), 8))
    while not fits(bm) and bm > 8:
        bm = max(8, _round_up(bm // 2, 8))
    return bm


# --------------------------------------------------------------------------
# Kernels
# --------------------------------------------------------------------------
def _udv_kernel_resident(x_ref, w1_ref, w2_ref, o_ref):
    """One batch tile: fused fc1 -> (folded diag) -> fc2.

    x_ref  : [bm, K]        activations, native dtype (cast in-kernel)
    w1_ref : [K, H_pad]     fc1 weight, VMEM-resident, compute dtype
    w2_ref : [H_pad, N_pad] fc2 weight with diag folded in, VMEM-resident, f32
    o_ref  : [bm, N]        output tile (no lane-padding writeback)
    """
    x = x_ref[...]
    if x.dtype != w1_ref.dtype:
        x = x.astype(w1_ref.dtype)          # free VPU cast on a mem-bound kernel
    h = jnp.dot(x, w1_ref[...], preferred_element_type=jnp.float32)
    out = jnp.dot(h, w2_ref[...], preferred_element_type=jnp.float32)
    o_ref[...] = out[:, : o_ref.shape[1]].astype(o_ref.dtype)


def _udv_kernel_ktiled(x_ref, w1_ref, w2_ref, o_ref, h_acc):
    """Fallback for very large num_input: K tiled, fc1 accumulates in f32."""
    k = pl.program_id(1)

    @pl.when(k == 0)
    def _():
        h_acc[...] = jnp.zeros_like(h_acc)

    x = x_ref[...]
    if x.dtype != w1_ref.dtype:
        x = x.astype(w1_ref.dtype)
    h_acc[...] += jnp.dot(x, w1_ref[...], preferred_element_type=jnp.float32)

    @pl.when(k == pl.num_programs(1) - 1)
    def _():
        out = jnp.dot(h_acc[...], w2_ref[...], preferred_element_type=jnp.float32)
        o_ref[...] = out[:, : o_ref.shape[1]].astype(o_ref.dtype)


# --------------------------------------------------------------------------
# Wrappers
# --------------------------------------------------------------------------
def _forward_resident(x, w1_p, w2_p, *, K, N, budget, vmem_phys, bm_max):
    B = x.shape[0]
    x_flat = x.reshape(B, -1)
    if x_flat.shape[1] != K:
        raise ValueError(
            f"flattened input has {x_flat.shape[1]} features, expected {K}")
    _, H_pad = w1_p.shape
    N_pad = w2_p.shape[1]
    xb = x_flat.dtype.itemsize
    wb = w1_p.dtype.itemsize

    bm = _choose_bm(
        B, bm_max,
        lambda b: _resident_footprint(b, K, H_pad, N_pad, xb, wb) <= budget)
    n_tiles = _cdiv(B, bm)
    footprint = _resident_footprint(bm, K, H_pad, N_pad, xb, wb)
    vmem_limit = int(min(0.9 * vmem_phys, max(footprint + (8 << 20), 32 << 20)))

    out = pl.pallas_call(
        _udv_kernel_resident,
        out_shape=jax.ShapeDtypeStruct((B, N), jnp.float32),
        grid_spec=pltpu.PrefetchScalarGridSpec(
            num_scalar_prefetch=0,
            grid=(n_tiles,),
            in_specs=[
                pl.BlockSpec((bm, K), lambda i: (i, 0)),         # X tile (native dtype)
                pl.BlockSpec((K, H_pad), lambda i: (0, 0)),      # W1 (VMEM-resident)
                pl.BlockSpec((H_pad, N_pad), lambda i: (0, 0)),  # W2 (VMEM-resident)
            ],
            out_specs=pl.BlockSpec((bm, N), lambda i: (i, 0)),
        ),
        compiler_params=pltpu.CompilerParams(
            dimension_semantics=("parallel",),
            vmem_limit_bytes=vmem_limit,
        ),
    )(x_flat, w1_p, w2_p)

    return out.reshape(B) if N == 1 else out


def _forward_ktiled(x, w1_p, w2_p, *, K, N, tk, budget, vmem_phys, bm_max):
    B = x.shape[0]
    x_flat = x.reshape(B, -1)
    if x_flat.shape[1] != K:
        raise ValueError(
            f"flattened input has {x_flat.shape[1]} features, expected {K}")
    K_pad, H_pad = w1_p.shape
    N_pad = w2_p.shape[1]
    xb = x_flat.dtype.itemsize
    wb = w1_p.dtype.itemsize

    bm = _choose_bm(
        B, bm_max,
        lambda b: _ktiled_footprint(b, tk, H_pad, N_pad, xb, wb) <= budget)
    n_bt = _cdiv(B, bm)
    footprint = _ktiled_footprint(bm, tk, H_pad, N_pad, xb, wb)
    vmem_limit = int(min(0.9 * vmem_phys, max(footprint + (8 << 20), 32 << 20)))

    # Zero-pad X along K so the reduction never sees out-of-bounds garbage
    # (only the rare huge-K fallback pays this copy).
    x_p = x_flat if K_pad == K else jnp.pad(x_flat, ((0, 0), (0, K_pad - K)))

    out = pl.pallas_call(
        _udv_kernel_ktiled,
        out_shape=jax.ShapeDtypeStruct((B, N), jnp.float32),
        grid_spec=pltpu.PrefetchScalarGridSpec(
            num_scalar_prefetch=0,
            grid=(n_bt, K_pad // tk),
            in_specs=[
                pl.BlockSpec((bm, tk), lambda i, k: (i, k)),         # X tile
                pl.BlockSpec((tk, H_pad), lambda i, k: (k, 0)),      # W1 K-slab
                pl.BlockSpec((H_pad, N_pad), lambda i, k: (0, 0)),   # W2 resident
            ],
            out_specs=pl.BlockSpec((bm, N), lambda i, k: (i, 0)),
            scratch_shapes=[pltpu.VMEM((bm, H_pad), jnp.float32)],
        ),
        compiler_params=pltpu.CompilerParams(
            dimension_semantics=("parallel", "arbitrary"),
            vmem_limit_bytes=vmem_limit,
        ),
    )(x_p, w1_p, w2_p)

    return out.reshape(B) if N == 1 else out


def make_udv_net_1(w1, d, w2, *, compute_dtype=jnp.bfloat16, bm_max=1024):
    """One-time weight preparation; returns a jitted forward(x) callable.

    w1: [num_hidden_1, num_input]   (PyTorch nn.Linear weight layout)
    d : [num_hidden_1]              (D_singleConnection diagonal weights)
    w2: [num_output, num_hidden_1]  (PyTorch nn.Linear weight layout)

    compute_dtype is the fc1 (x @ W1) MXU input dtype; bf16 halves the
    dominant HBM traffic and is the native MXU path on v5e/v6e/v7x.  The fc1
    accumulation, the folded fc2 weight, fc2 itself and the output stay f32.
    """
    w1 = jnp.asarray(w1)
    d = jnp.asarray(d)
    w2 = jnp.asarray(w2)
    H, K = w1.shape
    N, H2 = w2.shape
    assert H2 == H and d.shape == (H,), (w1.shape, d.shape, w2.shape)

    H_pad = _round_up(H, 128)
    N_pad = _round_up(N, 128)
    wb = jnp.dtype(compute_dtype).itemsize

    vmem_phys = _vmem_physical_bytes()
    budget = (vmem_phys * 3) // 4            # per-generation tiling budget

    # fc2 weight with the learned diagonal folded in, kept in f32 (tiny).
    w2_eff = (d[:, None] * jnp.transpose(w2)).astype(jnp.float32)   # [H, N]
    w2_p = jax.device_put(
        jnp.zeros((H_pad, N_pad), jnp.float32).at[:H, :N].set(w2_eff))

    w1_t = jnp.transpose(w1).astype(compute_dtype)                   # [K, H]

    # Fast path: W1 fully VMEM-resident even at the smallest batch tile.
    if _resident_footprint(8, K, H_pad, N_pad, 4, wb) <= budget:
        w1_p = jax.device_put(
            jnp.zeros((K, H_pad), compute_dtype).at[:, :H].set(w1_t))
        fwd = jax.jit(functools.partial(
            _forward_resident, K=K, N=N, budget=budget,
            vmem_phys=vmem_phys, bm_max=bm_max))
    else:
        # Fallback only for very large num_input: stream W1 in K slabs.
        tk = 512 if K >= 512 else _round_up(K, 128)
        K_pad = _round_up(K, tk)
        w1_p = jax.device_put(
            jnp.zeros((K_pad, H_pad), compute_dtype).at[:K, :H].set(w1_t))
        fwd = jax.jit(functools.partial(
            _forward_ktiled, K=K, N=N, tk=tk, budget=budget,
            vmem_phys=vmem_phys, bm_max=bm_max))

    def forward(x):
        return fwd(x, w1_p, w2_p)

    return forward


if __name__ == "__main__":
    # Small shapes consistent with the module: NCHW input -> flatten.
    B, C, Hs, Ws = 2, 4, 16, 16              # num_input = C*Hs*Ws = 1024
    num_input = C * Hs * Ws
    num_hidden_1 = 32
    num_output = 1

    key = jax.random.PRNGKey(0)
    kx, k1, kd, k2 = jax.random.split(key, 4)
    x = jax.random.normal(kx, (B, C, Hs, Ws), dtype=jnp.float32)
    # PyTorch nn.Linear weight layout: [out, in].
    w1 = jax.random.normal(k1, (num_hidden_1, num_input), dtype=jnp.float32) * 0.05
    d = jax.random.normal(kd, (num_hidden_1,), dtype=jnp.float32)
    w2 = jax.random.normal(k2, (num_output, num_hidden_1), dtype=jnp.float32) * 0.05

    x_flat = x.reshape(B, -1)
    hp = jax.lax.Precision.HIGHEST            # true-f32 reference matmuls

    # ---- f32 path ----------------------------------------------------------
    forward_f32 = make_udv_net_1(w1, d, w2, compute_dtype=jnp.float32)
    out_f32 = jax.block_until_ready(forward_f32(x))
    ref_f32 = jnp.dot(jnp.dot(x_flat, w1.T, precision=hp) * d, w2.T, precision=hp)
    ref_f32 = ref_f32.reshape(B) if num_output == 1 else ref_f32
    assert out_f32.shape == ref_f32.shape, (out_f32.shape, ref_f32.shape)
    # Tolerance covers XLA-vs-Mosaic f32 matmul pass-count differences.
    assert jnp.allclose(out_f32, ref_f32, atol=2e-2, rtol=2e-2), "f32 mismatch"

    # ---- bf16 MXU path (default): bf16 x/W1, f32 accumulation + f32 fc2 ----
    forward_bf16 = make_udv_net_1(w1, d, w2, compute_dtype=jnp.bfloat16)
    out_bf16 = jax.block_until_ready(forward_bf16(x))
    xb = x_flat.astype(jnp.bfloat16).astype(jnp.float32)
    w1b = w1.astype(jnp.bfloat16).astype(jnp.float32)
    ref_bf16 = jnp.dot(jnp.dot(xb, w1b.T, precision=hp),
                       (d[:, None] * w2.T).astype(jnp.float32), precision=hp)
    ref_bf16 = ref_bf16.reshape(B) if num_output == 1 else ref_bf16
    assert out_bf16.shape == ref_bf16.shape, (out_bf16.shape, ref_bf16.shape)
    assert jnp.allclose(out_bf16, ref_bf16, atol=3e-2, rtol=3e-2), "bf16 mismatch"

    print("KERNEL_OK")
</pallas_src>

<mosaic_0001>
module attributes {stable_mosaic.version = 11 : i64} {
  func.func @_udv_kernel_resident(%arg0: i32, %arg1: memref<2x1024xf32, #tpu.memory_space<vmem>>, %arg2: memref<1024x128xf32, #tpu.memory_space<vmem>>, %arg3: memref<128x128xf32, #tpu.memory_space<vmem>>, %arg4: memref<2x1xf32, #tpu.memory_space<vmem>>) attributes {dimension_semantics = [#tpu.dimension_semantics<parallel>], iteration_bounds = array<i64: 1>, scalar_prefetch = 0 : i64, scratch_operands = 0 : i64, tpu.core_type = #tpu.core_type<tc>, window_params = [{transform_indices = @transform_0, window_bounds = array<i64: 2, 1024>}, {pipeline_mode = #tpu.pipeline_mode<synchronous>, transform_indices = @transform_1, window_bounds = array<i64: 1024, 128>}, {pipeline_mode = #tpu.pipeline_mode<synchronous>, transform_indices = @transform_2, window_bounds = array<i64: 128, 128>}, {transform_indices = @transform_3, window_bounds = array<i64: 2, 1>}]} {
    %c0 = arith.constant 0 : index
    %c0_0 = arith.constant 0 : index
    %0 = vector.load %arg1[%c0, %c0_0] : memref<2x1024xf32, #tpu.memory_space<vmem>>, vector<2x1024xf32>
    %c0_1 = arith.constant 0 : index
    %c0_2 = arith.constant 0 : index
    %1 = vector.load %arg2[%c0_1, %c0_2] : memref<1024x128xf32, #tpu.memory_space<vmem>>, vector<1024x128xf32>
    %cst = arith.constant dense<0.000000e+00> : vector<2x128xf32>
    %2 = tpu.matmul %0, %1, %cst {dimension_numbers = #tpu.dot_dimension_numbers<[1], [0], [0], [1], [0, 0, 1, 1], [], []>} : vector<2x1024xf32>, vector<1024x128xf32>, vector<2x128xf32> -> vector<2x128xf32>
    %c0_3 = arith.constant 0 : index
    %c0_4 = arith.constant 0 : index
    %3 = vector.load %arg3[%c0_3, %c0_4] : memref<128x128xf32, #tpu.memory_space<vmem>>, vector<128x128xf32>
    %cst_5 = arith.constant dense<0.000000e+00> : vector<2x128xf32>
    %4 = tpu.matmul %2, %3, %cst_5 {dimension_numbers = #tpu.dot_dimension_numbers<[1], [0], [0], [1], [0, 0, 1, 1], [], []>} : vector<2x128xf32>, vector<128x128xf32>, vector<2x128xf32> -> vector<2x128xf32>
    %5 = vector.extract_strided_slice %4 {offsets = [0, 0], sizes = [2, 1], strides = [1, 1]} : vector<2x128xf32> to vector<2x1xf32>
    %c0_6 = arith.constant 0 : index
    %c0_7 = arith.constant 0 : index
    %6 = vector.load %arg4[%c0_6, %c0_7] : memref<2x1xf32, #tpu.memory_space<vmem>>, vector<2x1xf32>
    tpu.vector_store %arg4[%c0_6, %c0_7], %5 {strides = array<i32>} : memref<2x1xf32, #tpu.memory_space<vmem>>, vector<2x1xf32>,
    return
  }
  func.func @transform_0(%arg0: i32) -> (i32, i32) {
    %c0_i32 = arith.constant 0 : i32
    %c0_i32_0 = arith.constant 0 : i32
    return %arg0, %c0_i32 : i32, i32
  }
  func.func @transform_1(%arg0: i32) -> (i32, i32) {
    %c0_i32 = arith.constant 0 : i32
    %c0_i32_0 = arith.constant 0 : i32
    %c0_i32_1 = arith.constant 0 : i32
    return %c0_i32, %c0_i32_0 : i32, i32
  }
  func.func @transform_2(%arg0: i32) -> (i32, i32) {
    %c0_i32 = arith.constant 0 : i32
    %c0_i32_0 = arith.constant 0 : i32
    %c0_i32_1 = arith.constant 0 : i32
    return %c0_i32, %c0_i32_0 : i32, i32
  }
  func.func @transform_3(%arg0: i32) -> (i32, i32) {
    %c0_i32 = arith.constant 0 : i32
    %c0_i32_0 = arith.constant 0 : i32
    return %arg0, %c0_i32 : i32, i32
  }
}

</mosaic_0001>

<llo_original>
// kernel: _forward_resident.1
$region0: #{_forward_resident.1}
  #allocation0 [shape = 'u32[]', space=smem, size = 0x4, offset = 0x4, fixed_abs, tag = 'smem constant byte address 0x4 - core index']
  #allocation1 [shape = 'u32[72,128]{1,0:T(1,128)}', space=vmem, size = 0x9000, scoped, tag = 'internal scratch']
  %s0 = inlined_call_operand.vmem [shape: f32[2,1024], index: 0, kind: input, shape index: {}]
  %s1 = inlined_call_operand.hbm [shape: f32[1024,128], index: 1, kind: input, shape index: {}]
  %s2 = inlined_call_operand.vmem [shape: f32[128,128], index: 2, kind: input, shape index: {}]
  %s3 = inlined_call_operand.vmem [shape: f32[2,1], index: 3, kind: output, shape index: {}]
  %s4 = sld [smem:[#allocation0]]
  $region26: #{_forward_resident.1} parent=0
    _
  %s6 = ssub.s32 1, %s4
  %s7 = scalar_select 0, %s6, %s4
  $region1: #{_forward_resident.1} parent=0
    #allocation2 [shape = 'u8[524288]{0}', space=vmem, size = 0x80000, scoped, tag = 'input window, operand 1, single buffered']
    #allocation3 [shape = 's32[1]{0}', space=sflag, size = 0x4, scoped, tag = 'scoped memory for _forward_resident.1']
    %8 = vsyncpa [#allocation3], 0
    // Predicated region
    $region2: #{_forward_resident.1} parent=1 // pred_check
      _
    $region3: #{_forward_resident.1} parent=1 // pred_check_branch
      %10 = sbr.rel (0) target = $region5
    $region4: #{_forward_resident.1} parent=1 // pred_region
      _
    $region5: #{_forward_resident.1} parent=1 // pred_fallthru
      _
    // Predicated region
    $region6: #{_forward_resident.1} parent=1 // pred_check
      _
    $region7: #{_forward_resident.1} parent=1 // pred_check_branch
      %12 = sbr.rel (0) target = $region9
    $region8: #{_forward_resident.1} parent=1 // pred_region
      %14 = vsyncadd [#allocation3], 0
      %s15 = sshll.u32 %s1, 4
      %s16 = int_to_ptr.hbm [resolvable:$true] %s15
      %s17 = sshll.u32 [#allocation2], 4
      %s18 = int_to_ptr.vmem [resolvable:$true] %s17
      %23 = dma.hbm_to_vmem [thread:$0]  %s16, 16384, %s18, [#allocation3], 128, 128, 8
    $region9: #{_forward_resident.1} parent=1 // pred_fallthru
      _
    // Predicated region
    $region10: #{_forward_resident.1} parent=1 // pred_check
      _
    $region11: #{_forward_resident.1} parent=1 // pred_check_branch
      %25 = sbr.rel (0) target = $region13
    $region12: #{_forward_resident.1} parent=1 // pred_region
      _
    $region13: #{_forward_resident.1} parent=1 // pred_fallthru
      _
    // Predicated region
    $region14: #{_forward_resident.1} parent=1 // pred_check
      _
    $region15: #{_forward_resident.1} parent=1 // pred_check_branch
      %27 = sbr.rel (0) target = $region17
    $region16: #{_forward_resident.1} parent=1 // pred_region
      %29 = dma.done [#allocation3], 16384
    $region17: #{_forward_resident.1} parent=1 // pred_fallthru
      _
    %v30 = vld [vmem:[%s0] sm:$0xff]
    %v31 = vld [vmem:[%s0 + $0x8] sm:$0xff]
    %v32 = vld [vmem:[#allocation2] sm:$0xff]
    %v33 = vld [vmem:[#allocation2 + $0x8] sm:$0xff]
    %v34 = vld [vmem:[#allocation2 + $0x10] sm:$0xff]
    %v35 = vld [vmem:[#allocation2 + $0x18] sm:$0xff]
    %v36 = vld [vmem:[#allocation2 + $0x20] sm:$0xff]
    %v37 = vld [vmem:[#allocation2 + $0x28] sm:$0xff]
    %v38 = vld [vmem:[#allocation2 + $0x30] sm:$0xff]
    %v39 = vld [vmem:[#allocation2 + $0x38] sm:$0xff]
    %v40 = vld [vmem:[#allocation2 + $0x40] sm:$0xff]
    %v41 = vld [vmem:[#allocation2 + $0x48] sm:$0xff]
    %v42 = vld [vmem:[#allocation2 + $0x50] sm:$0xff]
    %v43 = vld [vmem:[#allocation2 + $0x58] sm:$0xff]
    %v44 = vld [vmem:[#allocation2 + $0x60] sm:$0xff]
    %v45 = vld [vmem:[#allocation2 + $0x68] sm:$0xff]
    %v46 = vld [vmem:[#allocation2 + $0x70] sm:$0xff]
    %v47 = vld [vmem:[#allocation2 + $0x78] sm:$0xff]
    %v48 = vld [vmem:[#allocation2 + $0x80] sm:$0xff]
    %v49 = vld [vmem:[#allocation2 + $0x88] sm:$0xff]
    %v50 = vld [vmem:[#allocation2 + $0x90] sm:$0xff]
    %v51 = vld [vmem:[#allocation2 + $0x98] sm:$0xff]
    %v52 = vld [vmem:[#allocation2 + $0xa0] sm:$0xff]
    %v53 = vld [vmem:[#allocation2 + $0xa8] sm:$0xff]
    %v54 = vld [vmem:[#allocation2 + $0xb0] sm:$0xff]
    %v55 = vld [vmem:[#allocation2 + $0xb8] sm:$0xff]
    %v56 = vld [vmem:[#allocation2 + $0xc0] sm:$0xff]
    %v57 = vld [vmem:[#allocation2 + $0xc8] sm:$0xff]
    %v58 = vld [vmem:[#allocation2 + $0xd0] sm:$0xff]
    %v59 = vld [vmem:[#allocation2 + $0xd8] sm:$0xff]
    %v60 = vld [vmem:[#allocation2 + $0xe0] sm:$0xff]
    %v61 = vld [vmem:[#allocation2 + $0xe8] sm:$0xff]
    %v62 = vld [vmem:[#allocation2 + $0xf0] sm:$0xff]
    %v63 = vld [vmem:[#allocation2 + $0xf8] sm:$0xff]
    %v64 = vld [vmem:[#allocation2 + $0x100] sm:$0xff]
    %v65 = vld [vmem:[#allocation2 + $0x108] sm:$0xff]
    %v66 = vld [vmem:[#allocation2 + $0x110] sm:$0xff]
    %v67 = vld [vmem:[#allocation2 + $0x118] sm:$0xff]
    %v68 = vld [vmem:[#allocation2 + $0x120] sm:$0xff]
    %v69 = vld [vmem:[#allocation2 + $0x128] sm:$0xff]
    %v70 = vld [vmem:[#allocation2 + $0x130] sm:$0xff]
    %v71 = vld [vmem:[#allocation2 + $0x138] sm:$0xff]
    %v72 = vld [vmem:[#allocation2 + $0x140] sm:$0xff]
    %v73 = vld [vmem:[#allocation2 + $0x148] sm:$0xff]
    %v74 = vld [vmem:[#allocation2 + $0x150] sm:$0xff]
    %v75 = vld [vmem:[#allocation2 + $0x158] sm:$0xff]
    %v76 = vld [vmem:[#allocation2 + $0x160] sm:$0xff]
    %v77 = vld [vmem:[#allocation2 + $0x168] sm:$0xff]
    %v78 = vld [vmem:[#allocation2 + $0x170] sm:$0xff]
    %v79 = vld [vmem:[#allocation2 + $0x178] sm:$0xff]
    %v80 = vld [vmem:[#allocation2 + $0x180] sm:$0xff]
    %v81 = vld [vmem:[#allocation2 + $0x188] sm:$0xff]
    %v82 = vld [vmem:[#allocation2 + $0x190] sm:$0xff]
    %v83 = vld [vmem:[#allocation2 + $0x198] sm:$0xff]
    %v84 = vld [vmem:[#allocation2 + $0x1a0] sm:$0xff]
    %v85 = vld [vmem:[#allocation2 + $0x1a8] sm:$0xff]
    %v86 = vld [vmem:[#allocation2 + $0x1b0] sm:$0xff]
    %v87 = vld [vmem:[#allocation2 + $0x1b8] sm:$0xff]
    %v88 = vld [vmem:[#allocation2 + $0x1c0] sm:$0xff]
    %v89 = vld [vmem:[#allocation2 + $0x1c8] sm:$0xff]
    %v90 = vld [vmem:[#allocation2 + $0x1d0] sm:$0xff]
    %v91 = vld [vmem:[#allocation2 + $0x1d8] sm:$0xff]
    %v92 = vld [vmem:[#allocation2 + $0x1e0] sm:$0xff]
    %v93 = vld [vmem:[#allocation2 + $0x1e8] sm:$0xff]
    %v94 = vld [vmem:[#allocation2 + $0x1f0] sm:$0xff]
    %v95 = vld [vmem:[#allocation2 + $0x1f8] sm:$0xff]
    %v96 = vld [vmem:[#allocation2 + $0x200] sm:$0xff]
    %v97 = vld [vmem:[#allocation2 + $0x208] sm:$0xff]
    %v98 = vld [vmem:[#allocation2 + $0x210] sm:$0xff]
    %v99 = vld [vmem:[#allocation2 + $0x218] sm:$0xff]
    %v100 = vld [vmem:[#allocation2 + $0x220] sm:$0xff]
    %v101 = vld [vmem:[#allocation2 + $0x228] sm:$0xff]
    %v102 = vld [vmem:[#allocation2 + $0x230] sm:$0xff]
    %v103 = vld [vmem:[#allocation2 + $0x238] sm:$0xff]
    %v104 = vld [vmem:[#allocation2 + $0x240] sm:$0xff]
    %v105 = vld [vmem:[#allocation2 + $0x248] sm:$0xff]
    %v106 = vld [vmem:[#allocation2 + $0x250] sm:$0xff]
    %v107 = vld [vmem:[#allocation2 + $0x258] sm:$0xff]
    %v108 = vld [vmem:[#allocation2 + $0x260] sm:$0xff]
    %v109 = vld [vmem:[#allocation2 + $0x268] sm:$0xff]
    %v110 = vld [vmem:[#allocation2 + $0x270] sm:$0xff]
    %v111 = vld [vmem:[#allocation2 + $0x278] sm:$0xff]
    %v112 = vld [vmem:[#allocation2 + $0x280] sm:$0xff]
    %v113 = vld [vmem:[#allocation2 + $0x288] sm:$0xff]
    %v114 = vld [vmem:[#allocation2 + $0x290] sm:$0xff]
    %v115 = vld [vmem:[#allocation2 + $0x298] sm:$0xff]
    %v116 = vld [vmem:[#allocation2 + $0x2a0] sm:$0xff]
    %v117 = vld [vmem:[#allocation2 + $0x2a8] sm:$0xff]
    %v118 = vld [vmem:[#allocation2 + $0x2b0] sm:$0xff]
    %v119 = vld [vmem:[#allocation2 + $0x2b8] sm:$0xff]
    %v120 = vld [vmem:[#allocation2 + $0x2c0] sm:$0xff]
    %v121 = vld [vmem:[#allocation2 + $0x2c8] sm:$0xff]
    %v122 = vld [vmem:[#allocation2 + $0x2d0] sm:$0xff]
    %v123 = vld [vmem:[#allocation2 + $0x2d8] sm:$0xff]
    %v124 = vld [vmem:[#allocation2 + $0x2e0] sm:$0xff]
    %v125 = vld [vmem:[#allocation2 + $0x2e8] sm:$0xff]
    %v126 = vld [vmem:[#allocation2 + $0x2f0] sm:$0xff]
    %v127 = vld [vmem:[#allocation2 + $0x2f8] sm:$0xff]
    %v128 = vld [vmem:[#allocation2 + $0x300] sm:$0xff]
    %v129 = vld [vmem:[#allocation2 + $0x308] sm:$0xff]
    %v130 = vld [vmem:[#allocation2 + $0x310] sm:$0xff]
    %v131 = vld [vmem:[#allocation2 + $0x318] sm:$0xff]
    %v132 = vld [vmem:[#allocation2 + $0x320] sm:$0xff]
    %v133 = vld [vmem:[#allocation2 + $0x328] sm:$0xff]
    %v134 = vld [vmem:[#allocation2 + $0x330] sm:$0xff]
    %v135 = vld [vmem:[#allocation2 + $0x338] sm:$0xff]
    %v136 = vld [vmem:[#allocation2 + $0x340] sm:$0xff]
    %v137 = vld [vmem:[#allocation2 + $0x348] sm:$0xff]
    %v138 = vld [vmem:[#allocation2 + $0x350] sm:$0xff]
    %v139 = vld [vmem:[#allocation2 + $0x358] sm:$0xff]
    %v140 = vld [vmem:[#allocation2 + $0x360] sm:$0xff]
    %v141 = vld [vmem:[#allocation2 + $0x368] sm:$0xff]
    %v142 = vld [vmem:[#allocation2 + $0x370] sm:$0xff]
    %v143 = vld [vmem:[#allocation2 + $0x378] sm:$0xff]
    %v144 = vld [vmem:[#allocation2 + $0x380] sm:$0xff]
    %v145 = vld [vmem:[#allocation2 + $0x388] sm:$0xff]
    %v146 = vld [vmem:[#allocation2 + $0x390] sm:$0xff]
    %v147 = vld [vmem:[#allocation2 + $0x398] sm:$0xff]
    %v148 = vld [vmem:[#allocation2 + $0x3a0] sm:$0xff]
    %v149 = vld [vmem:[#allocation2 + $0x3a8] sm:$0xff]
    %v150 = vld [vmem:[#allocation2 + $0x3b0] sm:$0xff]
    %v151 = vld [vmem:[#allocation2 + $0x3b8] sm:$0xff]
    %v152 = vld [vmem:[#allocation2 + $0x3c0] sm:$0xff]
    %v153 = vld [vmem:[#allocation2 + $0x3c8] sm:$0xff]
    %v154 = vld [vmem:[#allocation2 + $0x3d0] sm:$0xff]
    %v155 = vld [vmem:[#allocation2 + $0x3d8] sm:$0xff]
    %v156 = vld [vmem:[#allocation2 + $0x3e0] sm:$0xff]
    %v157 = vld [vmem:[#allocation2 + $0x3e8] sm:$0xff]
    %v158 = vld [vmem:[#allocation2 + $0x3f0] sm:$0xff]
    %v159 = vld [vmem:[#allocation2 + $0x3f8] sm:$0xff]
    %162 = vst [vmem:[#allocation1] ss:$4 sm:$0xff] %v30
    %s163 = scalar_lea.vmem [#allocation1], 32
    %164 = vst [vmem:[%s163] ss:$4 sm:$0xff] %v31
    %v165 = vld.sshfl [vmem:[#allocation1] sm:$0xff pattern:$0x73625140]
    %v166 = vld.sshfl [vmem:[#allocation1 + $0x8] sm:$0xff pattern:$0x73625140]
    %v167 = vld.sshfl [vmem:[#allocation1 + $0x10] sm:$0xff pattern:$0x73625140]
    %v168 = vld.sshfl [vmem:[#allocation1 + $0x18] sm:$0xff pattern:$0x73625140]
    %v169 = vld.sshfl [vmem:[#allocation1 + $0x20] sm:$0xff pattern:$0x73625140]
    %v170 = vld.sshfl [vmem:[#allocation1 + $0x28] sm:$0xff pattern:$0x73625140]
    %v171 = vld.sshfl [vmem:[#allocation1 + $0x30] sm:$0xff pattern:$0x73625140]
    %v172 = vld.sshfl [vmem:[#allocation1 + $0x38] sm:$0xff pattern:$0x73625140]
    %181 = vmatpush.msra.mxu0 %v47
    %182 = vmatpush.msra.mxu0 %v46
    %183 = vmatpush.msra.mxu0 %v45
    %184 = vmatpush.msra.mxu0 %v44
    %185 = vmatpush.msra.mxu0 %v43
    %186 = vmatpush.msra.mxu0 %v42
    %187 = vmatpush.msra.mxu0 %v41
    %188 = vmatpush.msra.mxu0 %v40
    %189 = vmatpush.msra.mxu0 %v39
    %190 = vmatpush.msra.mxu0 %v38
    %191 = vmatpush.msra.mxu0 %v37
    %192 = vmatpush.msra.mxu0 %v36
    %193 = vmatpush.msra.mxu0 %v35
    %194 = vmatpush.msra.mxu0 %v34
    %195 = vmatpush.msra.mxu0 %v33
    %196 = vmatpush.msra.mxu0 %v32
    %197 = vmatmul.f32.gmra.mxu0 %v165
    %v198 = vpop.f32.mrf.mxu0
    %v199 = vadd.f32 0.0, %v198
    %200 = vdwg.mxu0
    %201 = vmatpush.msra.mxu0 %v63
    %202 = vmatpush.msra.mxu0 %v62
    %203 = vmatpush.msra.mxu0 %v61
    %204 = vmatpush.msra.mxu0 %v60
    %205 = vmatpush.msra.mxu0 %v59
    %206 = vmatpush.msra.mxu0 %v58
    %207 = vmatpush.msra.mxu0 %v57
    %208 = vmatpush.msra.mxu0 %v56
    %209 = vmatpush.msra.mxu0 %v55
    %210 = vmatpush.msra.mxu0 %v54
    %211 = vmatpush.msra.mxu0 %v53
    %212 = vmatpush.msra.mxu0 %v52
    %213 = vmatpush.msra.mxu0 %v51
    %214 = vmatpush.msra.mxu0 %v50
    %215 = vmatpush.msra.mxu0 %v49
    %216 = vmatpush.msra.mxu0 %v48
    %217 = vmatmul.f32.gmra.mxu0 %v166
    %v218 = vpop.f32.mrf.mxu0
    %v219 = vadd.f32 %v199, %v218
    %220 = vdwg.mxu0
    %221 = vmatpush.msra.mxu0 %v79
    %222 = vmatpush.msra.mxu0 %v78
    %223 = vmatpush.msra.mxu0 %v77
    %224 = vmatpush.msra.mxu0 %v76
    %225 = vmatpush.msra.mxu0 %v75
    %226 = vmatpush.msra.mxu0 %v74
    %227 = vmatpush.msra.mxu0 %v73
    %228 = vmatpush.msra.mxu0 %v72
    %229 = vmatpush.msra.mxu0 %v71
    %230 = vmatpush.msra.mxu0 %v70
    %231 = vmatpush.msra.mxu0 %v69
    %232 = vmatpush.msra.mxu0 %v68
    %233 = vmatpush.msra.mxu0 %v67
    %234 = vmatpush.msra.mxu0 %v66
    %235 = vmatpush.msra.mxu0 %v65
    %236 = vmatpush.msra.mxu0 %v64
    %237 = vmatmul.f32.gmra.mxu0 %v167
    %v238 = vpop.f32.mrf.mxu0
    %v239 = vadd.f32 %v219, %v238
    %240 = vdwg.mxu0
    %241 = vmatpush.msra.mxu0 %v95
    %242 = vmatpush.msra.mxu0 %v94
    %243 = vmatpush.msra.mxu0 %v93
    %244 = vmatpush.msra.mxu0 %v92
    %245 = vmatpush.msra.mxu0 %v91
    %246 = vmatpush.msra.mxu0 %v90
    %247 = vmatpush.msra.mxu0 %v89
    %248 = vmatpush.msra.mxu0 %v88
    %249 = vmatpush.msra.mxu0 %v87
    %250 = vmatpush.msra.mxu0 %v86
    %251 = vmatpush.msra.mxu0 %v85
    %252 = vmatpush.msra.mxu0 %v84
    %253 = vmatpush.msra.mxu0 %v83
    %254 = vmatpush.msra.mxu0 %v82
    %255 = vmatpush.msra.mxu0 %v81
    %256 = vmatpush.msra.mxu0 %v80
    %257 = vmatmul.f32.gmra.mxu0 %v168
    %v258 = vpop.f32.mrf.mxu0
    %v259 = vadd.f32 %v239, %v258
    %260 = vdwg.mxu0
    %261 = vmatpush.msra.mxu0 %v111
    %262 = vmatpush.msra.mxu0 %v110
    %263 = vmatpush.msra.mxu0 %v109
    %264 = vmatpush.msra.mxu0 %v108
    %265 = vmatpush.msra.mxu0 %v107
    %266 = vmatpush.msra.mxu0 %v106
    %267 = vmatpush.msra.mxu0 %v105
    %268 = vmatpush.msra.mxu0 %v104
    %269 = vmatpush.msra.mxu0 %v103
    %270 = vmatpush.msra.mxu0 %v102
    %271 = vmatpush.msra.mxu0 %v101
    %272 = vmatpush.msra.mxu0 %v100
    %273 = vmatpush.msra.mxu0 %v99
    %274 = vmatpush.msra.mxu0 %v98
    %275 = vmatpush.msra.mxu0 %v97
    %276 = vmatpush.msra.mxu0 %v96
    %277 = vmatmul.f32.gmra.mxu0 %v169
    %v278 = vpop.f32.mrf.mxu0
    %v279 = vadd.f32 %v259, %v278
    %280 = vdwg.mxu0
    %281 = vmatpush.msra.mxu0 %v127
    %282 = vmatpush.msra.mxu0 %v126
    %283 = vmatpush.msra.mxu0 %v125
    %284 = vmatpush.msra.mxu0 %v124
    %285 = vmatpush.msra.mxu0 %v123
    %286 = vmatpush.msra.mxu0 %v122
    %287 = vmatpush.msra.mxu0 %v121
    %288 = vmatpush.msra.mxu0 %v120
    %289 = vmatpush.msra.mxu0 %v119
    %290 = vmatpush.msra.mxu0 %v118
    %291 = vmatpush.msra.mxu0 %v117
    %292 = vmatpush.msra.mxu0 %v116
    %293 = vmatpush.msra.mxu0 %v115
    %294 = vmatpush.msra.mxu0 %v114
    %295 = vmatpush.msra.mxu0 %v113
    %296 = vmatpush.msra.mxu0 %v112
    %297 = vmatmul.f32.gmra.mxu0 %v170
    %v298 = vpop.f32.mrf.mxu0
    %v299 = vadd.f32 %v279, %v298
    %300 = vdwg.mxu0
    %301 = vmatpush.msra.mxu0 %v143
    %302 = vmatpush.msra.mxu0 %v142
    %303 = vmatpush.msra.mxu0 %v141
    %304 = vmatpush.msra.mxu0 %v140
    %305 = vmatpush.msra.mxu0 %v139
    %306 = vmatpush.msra.mxu0 %v138
    %307 = vmatpush.msra.mxu0 %v137
    %308 = vmatpush.msra.mxu0 %v136
    %309 = vmatpush.msra.mxu0 %v135
    %310 = vmatpush.msra.mxu0 %v134
    %311 = vmatpush.msra.mxu0 %v133
    %312 = vmatpush.msra.mxu0 %v132
    %313 = vmatpush.msra.mxu0 %v131
    %314 = vmatpush.msra.mxu0 %v130
    %315 = vmatpush.msra.mxu0 %v129
    %316 = vmatpush.msra.mxu0 %v128
    %317 = vmatmul.f32.gmra.mxu0 %v171
    %v318 = vpop.f32.mrf.mxu0
    %v319 = vadd.f32 %v299, %v318
    %320 = vdwg.mxu0
    %321 = vmatpush.msra.mxu0 %v159
    %322 = vmatpush.msra.mxu0 %v158
    %323 = vmatpush.msra.mxu0 %v157
    %324 = vmatpush.msra.mxu0 %v156
    %325 = vmatpush.msra.mxu0 %v155
    %326 = vmatpush.msra.mxu0 %v154
    %327 = vmatpush.msra.mxu0 %v153
    %328 = vmatpush.msra.mxu0 %v152
    %329 = vmatpush.msra.mxu0 %v151
    %330 = vmatpush.msra.mxu0 %v150
    %331 = vmatpush.msra.mxu0 %v149
    %332 = vmatpush.msra.mxu0 %v148
    %333 = vmatpush.msra.mxu0 %v147
    %334 = vmatpush.msra.mxu0 %v146
    %335 = vmatpush.msra.mxu0 %v145
    %336 = vmatpush.msra.mxu0 %v144
    %337 = vmatmul.f32.gmra.mxu0 %v172
    %v338 = vpop.f32.mrf.mxu0
    %v339 = vadd.f32 %v319, %v338
    %340 = vdwg.mxu0
    %v341 = vld [vmem:[%s2] sm:$0xff]
    %v342 = vld [vmem:[%s2 + $0x8] sm:$0xff]
    %v343 = vld [vmem:[%s2 + $0x10] sm:$0xff]
    %v344 = vld [vmem:[%s2 + $0x18] sm:$0xff]
    %v345 = vld [vmem:[%s2 + $0x20] sm:$0xff]
    %v346 = vld [vmem:[%s2 + $0x28] sm:$0xff]
    %v347 = vld [vmem:[%s2 + $0x30] sm:$0xff]
    %v348 = vld [vmem:[%s2 + $0x38] sm:$0xff]
    %v349 = vld [vmem:[%s2 + $0x40] sm:$0xff]
    %v350 = vld [vmem:[%s2 + $0x48] sm:$0xff]
    %v351 = vld [vmem:[%s2 + $0x50] sm:$0xff]
    %v352 = vld [vmem:[%s2 + $0x58] sm:$0xff]
    %v353 = vld [vmem:[%s2 + $0x60] sm:$0xff]
    %v354 = vld [vmem:[%s2 + $0x68] sm:$0xff]
    %v355 = vld [vmem:[%s2 + $0x70] sm:$0xff]
    %v356 = vld [vmem:[%s2 + $0x78] sm:$0xff]
    %357 = vmatpush.msra.mxu0 %v356
    %358 = vmatpush.msra.mxu0 %v355
    %359 = vmatpush.msra.mxu0 %v354
    %360 = vmatpush.msra.mxu0 %v353
    %361 = vmatpush.msra.mxu0 %v352
    %362 = vmatpush.msra.mxu0 %v351
    %363 = vmatpush.msra.mxu0 %v350
    %364 = vmatpush.msra.mxu0 %v349
    %365 = vmatpush.msra.mxu0 %v348
    %366 = vmatpush.msra.mxu0 %v347
    %367 = vmatpush.msra.mxu0 %v346
    %368 = vmatpush.msra.mxu0 %v345
    %369 = vmatpush.msra.mxu0 %v344
    %370 = vmatpush.msra.mxu0 %v343
    %371 = vmatpush.msra.mxu0 %v342
    %372 = vmatpush.msra.mxu0 %v341
    %373 = vmatmul.f32.gmra.mxu0 %v339
    %v374 = vpop.f32.mrf.mxu0
    %v375 = vadd.f32 0.0, %v374
    %376 = vdwg.mxu0
    %vm377 = vcmask 1024
    %378 = vst.msk [vmem:[%s3] sm:$0x3] %vm377, %v375
    // Predicated region
    $region18: #{_forward_resident.1} parent=1 // pred_check
      _
    $region19: #{_forward_resident.1} parent=1 // pred_check_branch
      %380 = sbr.rel (0) target = $region21
    $region20: #{_forward_resident.1} parent=1 // pred_region
      _
    $region21: #{_forward_resident.1} parent=1 // pred_fallthru
      _
    // Predicated region
    $region22: #{_forward_resident.1} parent=1 // pred_check
      _
    $region23: #{_forward_resident.1} parent=1 // pred_check_branch
      %382 = sbr.rel (0) target = $region25
    $region24: #{_forward_resident.1} parent=1 // pred_region
      _
    $region25: #{_forward_resident.1} parent=1 // pred_fallthru
      _
    %383 = vsyncpa [#allocation3], 1

</llo_original>
